<compile_context>
chip_gen: v6e
topology: v6e:2x2x1
jax: 0.10.0
libtpu: 0.0.40
codegen_flags: <defaults>
</compile_context>

<pallas_src>
import jax
import jax.numpy as jnp
from jax import lax
from jax.experimental import pallas as pl
from jax.experimental.pallas import tpu as pltpu


def _round_up(x, m):
    return ((x + m - 1) // m) * m


def _fused_decoder_kernel(m_ref, x0_ref, w_ref, b_ref, o_ref):
    """Single invocation: all layers looped in-kernel.

    m_ref  : [Np, Np]      bf16   fused graph operator (I - A@G)
    x0_ref : [Np, Cp]      f32    padded input features
    w_ref  : [L, Cp, Cp]   bf16   stacked (transposed, padded) weights
    b_ref  : [L, 1,  Cp]   f32    stacked padded biases
    o_ref  : [Np, Cp]      f32    output block, used as the activation carrier
    """
    num_layers = w_ref.shape[0]
    o_ref[...] = x0_ref[...]                # seed activation
    m_bf = m_ref[...]                       # resident bf16 operator

    def layer(l, carry):
        x_bf = o_ref[...].astype(jnp.bfloat16)
        # t = (I - A@G) @ x   (single MXU matmul, f32 accumulate)
        t = jnp.dot(m_bf, x_bf, preferred_element_type=jnp.float32)
        # linear layer: t @ W^T + b  (W already transposed/padded to [Cp, Cp])
        h = jnp.dot(t.astype(jnp.bfloat16), w_ref[l],
                    preferred_element_type=jnp.float32) + b_ref[l]
        # relu(leaky_relu(h, 0.01)) == relu(h)
        o_ref[...] = jnp.maximum(h, 0.0)
        return carry

    lax.fori_loop(0, num_layers, layer, 0, unroll=True)


def build_fused_operator(edge_index, edge_attr, num_nodes):
    """Plain-JAX glue, done once per graph (graph is fixed across layers):
    M = I - S with
      S[i, j] = sum_{e: dst_e=i, src_e=j} 1 / (edge_attr_e * E * deg_in(i))
    so that (x - scatter_mean(message)) == M @ x.
    Built with O(E) scatter-adds (no dense one-hot / [N,E] matmul)."""
    src = edge_index[0]
    dst = edge_index[1]
    n_edges = src.shape[0]
    ea = edge_attr.astype(jnp.float32)

    deg = jnp.zeros((num_nodes,), jnp.float32).at[dst].add(1.0)   # incoming count
    deg = jnp.maximum(deg, 1.0)                                   # scatter_mean: 0 for isolated
    edge_val = 1.0 / (ea * jnp.float32(n_edges)) / deg[dst]       # [E]
    s_op = jnp.zeros((num_nodes, num_nodes), jnp.float32).at[dst, src].add(edge_val)
    return jnp.eye(num_nodes, dtype=jnp.float32) - s_op           # [N, N]


def grafiti_decoder_module(x, edge_index, edge_attr, params):
    """Full module forward: all layers fused in one pallas_call, one grid step."""
    n_nodes, in_dim = x.shape
    num_layers = len(params)
    dims = [in_dim] + [w_t.shape[1] for w_t, _ in params]
    c_pad = _round_up(max(dims), 128)          # lane-dense channel padding
    n_pad = _round_up(n_nodes, 128)            # lane-dense node axis (MXU full-K)

    # Layer-invariant fused graph operator, zero-padded (padded rows/cols
    # contribute nothing; padded rows are sliced away at the end).
    m_op = build_fused_operator(edge_index, edge_attr, n_nodes)
    m_pad = jnp.zeros((n_pad, n_pad), jnp.float32).at[:n_nodes, :n_nodes].set(m_op)
    m_bf16 = m_pad.astype(jnp.bfloat16)
    x_pad = jnp.zeros((n_pad, c_pad), jnp.float32).at[:n_nodes, :in_dim].set(
        x.astype(jnp.float32))

    # Stack (zero-padded) weights / biases across layers; weights in bf16.
    w_stack = jnp.zeros((num_layers, c_pad, c_pad), jnp.float32)
    b_stack = jnp.zeros((num_layers, 1, c_pad), jnp.float32)
    for i, (w_t, b) in enumerate(params):
        ci, co = w_t.shape
        w_stack = w_stack.at[i, :ci, :co].set(w_t)
        b_stack = b_stack.at[i, 0, :co].set(b)
    w_bf16 = w_stack.astype(jnp.bfloat16)

    flops = num_layers * (2 * n_pad * n_pad * c_pad + 2 * n_pad * c_pad * c_pad)
    bytes_accessed = (2 * m_bf16.size + 4 * x_pad.size + 2 * w_bf16.size
                      + 4 * b_stack.size + 4 * n_pad * c_pad)
    vmem_bytes = int(min(max(4 * bytes_accessed, 16 << 20), 64 << 20))

    out = pl.pallas_call(
        _fused_decoder_kernel,
        out_shape=jax.ShapeDtypeStruct((n_pad, c_pad), jnp.float32),
        in_specs=[
            pl.BlockSpec(memory_space=pltpu.MemorySpace.VMEM),   # M (bf16, resident)
            pl.BlockSpec(memory_space=pltpu.MemorySpace.VMEM),   # x0 (f32)
            pl.BlockSpec(memory_space=pltpu.MemorySpace.VMEM),   # W stack (bf16)
            pl.BlockSpec(memory_space=pltpu.MemorySpace.VMEM),   # b stack (f32)
        ],
        out_specs=pl.BlockSpec(memory_space=pltpu.MemorySpace.VMEM),
        compiler_params=pltpu.CompilerParams(vmem_limit_bytes=vmem_bytes),
        cost_estimate=pl.CostEstimate(
            flops=flops, transcendentals=0, bytes_accessed=bytes_accessed),
    )(m_bf16, x_pad, w_bf16, b_stack)

    return out[:n_nodes, :dims[-1]]


def _reference(x, edge_index, edge_attr, params):
    """Pure-JAX f32 reference mirroring the PyTorch semantics (for validation)."""
    src, dst = edge_index[0], edge_index[1]
    n_nodes = x.shape[0]
    n_edges = src.shape[0]
    for w_t, b in params:
        x_j = x[src]
        msgs = x_j / edge_attr[:, None] / n_edges
        summed = jnp.zeros((n_nodes, x.shape[1]), jnp.float32).at[dst].add(msgs)
        count = jnp.maximum(
            jnp.zeros((n_nodes,), jnp.float32).at[dst].add(1.0), 1.0)
        aggr = summed / count[:, None]
        t = x - aggr
        h = t @ w_t + b[None, :]
        h = jnp.where(h >= 0.0, h, 0.01 * h)   # leaky_relu(0.01)
        x = jnp.maximum(h, 0.0)                # outer relu
    return x


def init_params(key, in_dim, layers):
    """Deterministic synthetic init matching nn.Linear(in, out) shapes."""
    params = []
    last = in_dim
    for hidden in layers:
        key, kw, kb = jax.random.split(key, 3)
        bound = 1.0 / jnp.sqrt(jnp.float32(last))
        # nn.Linear weight is [out, in]; store transposed [in, out] for x @ W^T.
        w_t = jax.random.uniform(kw, (last, hidden), jnp.float32, -bound, bound)
        b = jax.random.uniform(kb, (hidden,), jnp.float32, -bound, bound)
        params.append((w_t, b))
        last = hidden
    return params


if __name__ == "__main__":
    key = jax.random.PRNGKey(0)
    N_NODES = 16          # number of graph nodes
    N_EDGES = 32          # number of edges
    IN_DIM = 32           # input feature dim
    LAYERS = [32, 32]     # hidden dims (analogue of default [30, 30])

    key, kx, ks, kd, ka = jax.random.split(key, 5)
    x = jax.random.normal(kx, (N_NODES, IN_DIM), jnp.float32)
    src = jax.random.randint(ks, (N_EDGES,), 0, N_NODES, jnp.int32)
    dst = jax.random.randint(kd, (N_EDGES,), 0, N_NODES, jnp.int32)
    edge_index = jnp.stack([src, dst], axis=0)                  # [2, E]
    # edge_attr is a divisor in message(); keep it strictly positive.
    edge_attr = jax.random.uniform(ka, (N_EDGES,), jnp.float32, 0.5, 2.0)

    params = init_params(key, IN_DIM, LAYERS)

    out = grafiti_decoder_module(x, edge_index, edge_attr, params)
    out = jax.block_until_ready(out)

    ref = _reference(x, edge_index, edge_attr, params)
    assert out.shape == (N_NODES, LAYERS[-1])
    # bf16 MXU operands (per perf review) vs f32 reference -> relaxed tolerance.
    assert jnp.allclose(out, ref, atol=5e-2, rtol=5e-2), "mismatch vs reference"
    assert bool(jnp.all(jnp.isfinite(out))), "non-finite output"

    print("KERNEL_OK")
</pallas_src>

<mosaic_0001>
module attributes {stable_mosaic.version = 11 : i64} {
  func.func @_fused_decoder_kernel(%arg0: memref<128x128xbf16, #tpu.memory_space<vmem>>, %arg1: memref<128x128xf32, #tpu.memory_space<vmem>>, %arg2: memref<2x128x128xbf16, #tpu.memory_space<vmem>>, %arg3: memref<2x1x128xf32, #tpu.memory_space<vmem>>, %arg4: memref<128x128xf32, #tpu.memory_space<vmem>>) attributes {dimension_semantics = [], scalar_prefetch = 0 : i64, scratch_operands = 0 : i64, tpu.core_type = #tpu.core_type<tc>} {
    %c0 = arith.constant 0 : index
    %c0_0 = arith.constant 0 : index
    %0 = vector.load %arg1[%c0, %c0_0] : memref<128x128xf32, #tpu.memory_space<vmem>>, vector<128x128xf32>
    %c0_1 = arith.constant 0 : index
    %c0_2 = arith.constant 0 : index
    %1 = vector.load %arg4[%c0_1, %c0_2] : memref<128x128xf32, #tpu.memory_space<vmem>>, vector<128x128xf32>
    tpu.vector_store %arg4[%c0_1, %c0_2], %0 {strides = array<i32>} : memref<128x128xf32, #tpu.memory_space<vmem>>, vector<128x128xf32>,
    %c0_3 = arith.constant 0 : index
    %c0_4 = arith.constant 0 : index
    %2 = vector.load %arg0[%c0_3, %c0_4] : memref<128x128xbf16, #tpu.memory_space<vmem>>, vector<128x128xbf16>
    %c0_i32 = arith.constant 0 : i32
    %c0_5 = arith.constant 0 : index
    %c0_6 = arith.constant 0 : index
    %3 = vector.load %arg4[%c0_5, %c0_6] : memref<128x128xf32, #tpu.memory_space<vmem>>, vector<128x128xf32>
    %4 = arith.truncf %3 : vector<128x128xf32> to vector<128x128xbf16>
    %cst = arith.constant dense<0.000000e+00> : vector<128x128xf32>
    %5 = tpu.matmul %2, %4, %cst {dimension_numbers = #tpu.dot_dimension_numbers<[1], [0], [0], [1], [0, 0, 1, 1], [], []>} : vector<128x128xbf16>, vector<128x128xbf16>, vector<128x128xf32> -> vector<128x128xf32>
    %6 = arith.truncf %5 : vector<128x128xf32> to vector<128x128xbf16>
    %7 = arith.index_cast %c0_i32 : i32 to index
    %c0_7 = arith.constant 0 : index
    %c0_8 = arith.constant 0 : index
    %8 = vector.load %arg2[%7, %c0_7, %c0_8] : memref<2x128x128xbf16, #tpu.memory_space<vmem>>, vector<1x128x128xbf16>
    %9 = vector.shape_cast %8 : vector<1x128x128xbf16> to vector<128x128xbf16>
    %cst_9 = arith.constant dense<0.000000e+00> : vector<128x128xf32>
    %10 = tpu.matmul %6, %9, %cst_9 {dimension_numbers = #tpu.dot_dimension_numbers<[1], [0], [0], [1], [0, 0, 1, 1], [], []>} : vector<128x128xbf16>, vector<128x128xbf16>, vector<128x128xf32> -> vector<128x128xf32>
    %11 = arith.index_cast %c0_i32 : i32 to index
    %c0_10 = arith.constant 0 : index
    %c0_11 = arith.constant 0 : index
    %12 = vector.load %arg3[%11, %c0_10, %c0_11] : memref<2x1x128xf32, #tpu.memory_space<vmem>>, vector<1x1x128xf32>
    %13 = vector.shape_cast %12 : vector<1x1x128xf32> to vector<1x128xf32>
    %14 = vector.broadcast %13 : vector<1x128xf32> to vector<128x128xf32>
    %15 = arith.addf %10, %14 : vector<128x128xf32>
    %cst_12 = arith.constant 0.000000e+00 : f32
    %16 = vector.broadcast %cst_12 : f32 to vector<128x128xf32>
    %17 = arith.maximumf %15, %16 : vector<128x128xf32>
    %c0_13 = arith.constant 0 : index
    %c0_14 = arith.constant 0 : index
    %18 = vector.load %arg4[%c0_13, %c0_14] : memref<128x128xf32, #tpu.memory_space<vmem>>, vector<128x128xf32>
    tpu.vector_store %arg4[%c0_13, %c0_14], %17 {strides = array<i32>} : memref<128x128xf32, #tpu.memory_space<vmem>>, vector<128x128xf32>,
    %c1_i32 = arith.constant 1 : i32
    %c0_15 = arith.constant 0 : index
    %c0_16 = arith.constant 0 : index
    %19 = vector.load %arg4[%c0_15, %c0_16] : memref<128x128xf32, #tpu.memory_space<vmem>>, vector<128x128xf32>
    %20 = arith.truncf %19 : vector<128x128xf32> to vector<128x128xbf16>
    %cst_17 = arith.constant dense<0.000000e+00> : vector<128x128xf32>
    %21 = tpu.matmul %2, %20, %cst_17 {dimension_numbers = #tpu.dot_dimension_numbers<[1], [0], [0], [1], [0, 0, 1, 1], [], []>} : vector<128x128xbf16>, vector<128x128xbf16>, vector<128x128xf32> -> vector<128x128xf32>
    %22 = arith.truncf %21 : vector<128x128xf32> to vector<128x128xbf16>
    %23 = arith.index_cast %c1_i32 : i32 to index
    %c0_18 = arith.constant 0 : index
    %c0_19 = arith.constant 0 : index
    %24 = vector.load %arg2[%23, %c0_18, %c0_19] : memref<2x128x128xbf16, #tpu.memory_space<vmem>>, vector<1x128x128xbf16>
    %25 = vector.shape_cast %24 : vector<1x128x128xbf16> to vector<128x128xbf16>
    %cst_20 = arith.constant dense<0.000000e+00> : vector<128x128xf32>
    %26 = tpu.matmul %22, %25, %cst_20 {dimension_numbers = #tpu.dot_dimension_numbers<[1], [0], [0], [1], [0, 0, 1, 1], [], []>} : vector<128x128xbf16>, vector<128x128xbf16>, vector<128x128xf32> -> vector<128x128xf32>
    %27 = arith.index_cast %c1_i32 : i32 to index
    %c0_21 = arith.constant 0 : index
    %c0_22 = arith.constant 0 : index
    %28 = vector.load %arg3[%27, %c0_21, %c0_22] : memref<2x1x128xf32, #tpu.memory_space<vmem>>, vector<1x1x128xf32>
    %29 = vector.shape_cast %28 : vector<1x1x128xf32> to vector<1x128xf32>
    %30 = vector.broadcast %29 : vector<1x128xf32> to vector<128x128xf32>
    %31 = arith.addf %26, %30 : vector<128x128xf32>
    %cst_23 = arith.constant 0.000000e+00 : f32
    %32 = vector.broadcast %cst_23 : f32 to vector<128x128xf32>
    %33 = arith.maximumf %31, %32 : vector<128x128xf32>
    %c0_24 = arith.constant 0 : index
    %c0_25 = arith.constant 0 : index
    %34 = vector.load %arg4[%c0_24, %c0_25] : memref<128x128xf32, #tpu.memory_space<vmem>>, vector<128x128xf32>
    tpu.vector_store %arg4[%c0_24, %c0_25], %33 {strides = array<i32>} : memref<128x128xf32, #tpu.memory_space<vmem>>, vector<128x128xf32>,
    %c2_i32 = arith.constant 2 : i32
    return
  }
}

</mosaic_0001>

<llo_original>
// kernel: tpu_custom_call.1
$region0: #{tpu_custom_call.1}
  #allocation0 [shape = 'u32[]', space=smem, size = 0x4, offset = 0x4, fixed_abs, tag = 'smem constant byte address 0x4 - core index']
  #allocation1 [shape = 'u32[144,128]{1,0:T(1,128)}', space=vmem, size = 0x12000, scoped, tag = 'internal scratch']
  %s0 = inlined_call_operand.hbm [shape: bf16[128,128], index: 0, kind: input, shape index: {}]
  %s1 = inlined_call_operand.hbm [shape: f32[128,128], index: 1, kind: input, shape index: {}]
  %s2 = inlined_call_operand.hbm [shape: bf16[2,128,128], index: 2, kind: input, shape index: {}]
  %s3 = inlined_call_operand.vmem [shape: f32[2,1,128], index: 3, kind: input, shape index: {}]
  %s4 = inlined_call_operand.hbm [shape: f32[128,128], index: 4, kind: output, shape index: {}]
  %s5 = sld [smem:[#allocation0]]
  $region38: #{tpu_custom_call.1} parent=0
    _
  %s7 = ssub.s32 1, %s5
  %s8 = scalar_select 0, %s7, %s5
  $region1: #{tpu_custom_call.1} parent=0
    #allocation2 [shape = 'u8[32768]{0}', space=vmem, size = 0x8000, scoped, tag = 'input window, operand 0, single buffered']
    #allocation3 [shape = 's32[1]{0}', space=sflag, size = 0x4, scoped, tag = 'scoped memory for tpu_custom_call.1']
    #allocation4 [shape = 's32[1]{0}', space=sflag, size = 0x4, scoped, tag = 'scoped memory for tpu_custom_call.1']
    #allocation5 [shape = 'u8[65536]{0}', space=vmem, size = 0x10000, scoped, tag = 'input window, operand 1, single buffered']
    #allocation6 [shape = 's32[1]{0}', space=sflag, size = 0x4, scoped, tag = 'scoped memory for tpu_custom_call.1']
    #allocation7 [shape = 'u8[65536]{0}', space=vmem, size = 0x10000, scoped, tag = 'input window, operand 2, single buffered']
    #allocation8 [shape = 'u8[65536]{0}', space=vmem, size = 0x10000, scoped, tag = 'output window, operand 0, single buffered']
    %9 = vsyncpa [#allocation3], 0
    %10 = vsyncpa [#allocation6], 0
    %11 = vsyncpa [#allocation4], 0
    // Predicated region
    $region2: #{tpu_custom_call.1} parent=1 // pred_check
      _
    $region3: #{tpu_custom_call.1} parent=1 // pred_check_branch
      %13 = sbr.rel (0) target = $region5
    $region4: #{tpu_custom_call.1} parent=1 // pred_region
      %s15 = ssub.s32 1024, 1024
      %16 = vsyncadd [#allocation3], %s15
      %s17 = sshll.u32 [#allocation2], 4
      %s18 = int_to_ptr.vmem [resolvable:$true] %s17
      %23 = dma.hbm_to_vmem [thread:$0]  %s0, 1024, %s18, [#allocation3], 64, 64, 4
    $region5: #{tpu_custom_call.1} parent=1 // pred_fallthru
      _
    // Predicated region
    $region6: #{tpu_custom_call.1} parent=1 // pred_check
      _
    $region7: #{tpu_custom_call.1} parent=1 // pred_check_branch
      %25 = sbr.rel (0) target = $region9
    $region8: #{tpu_custom_call.1} parent=1 // pred_region
      %s27 = ssub.s32 2048, 2048
      %28 = vsyncadd [#allocation6], %s27
      %s29 = sshll.u32 [#allocation5], 4
      %s30 = int_to_ptr.vmem [resolvable:$true] %s29
      %35 = dma.hbm_to_vmem [thread:$0]  %s1, 2048, %s30, [#allocation6], 128, 128, 8
    $region9: #{tpu_custom_call.1} parent=1 // pred_fallthru
      _
    // Predicated region
    $region10: #{tpu_custom_call.1} parent=1 // pred_check
      _
    $region11: #{tpu_custom_call.1} parent=1 // pred_check_branch
      %37 = sbr.rel (0) target = $region13
    $region12: #{tpu_custom_call.1} parent=1 // pred_region
      %s39 = ssub.s32 2048, 2048
      %40 = vsyncadd [#allocation6], %s39
      %s41 = sshll.u32 [#allocation7], 4
      %s42 = int_to_ptr.vmem [resolvable:$true] %s41
      %47 = dma.hbm_to_vmem [thread:$0]  %s2, 2048, %s42, [#allocation6], 64, 64, 4
    $region13: #{tpu_custom_call.1} parent=1 // pred_fallthru
      _
    // Predicated region
    $region14: #{tpu_custom_call.1} parent=1 // pred_check
      _
    $region15: #{tpu_custom_call.1} parent=1 // pred_check_branch
      %49 = sbr.rel (0) target = $region17
    $region16: #{tpu_custom_call.1} parent=1 // pred_region
      _
    $region17: #{tpu_custom_call.1} parent=1 // pred_fallthru
      _
    // Predicated region
    $region18: #{tpu_custom_call.1} parent=1 // pred_check
      _
    $region19: #{tpu_custom_call.1} parent=1 // pred_check_branch
      %51 = sbr.rel (0) target = $region21
    $region20: #{tpu_custom_call.1} parent=1 // pred_region
      %52 = dma.done [#allocation3], 1024
    $region21: #{tpu_custom_call.1} parent=1 // pred_fallthru
      _
    // Predicated region
    $region22: #{tpu_custom_call.1} parent=1 // pred_check
      _
    $region23: #{tpu_custom_call.1} parent=1 // pred_check_branch
      %54 = sbr.rel (0) target = $region25
    $region24: #{tpu_custom_call.1} parent=1 // pred_region
      %55 = dma.done [#allocation6], 2048
    $region25: #{tpu_custom_call.1} parent=1 // pred_fallthru
      _
    // Predicated region
    $region26: #{tpu_custom_call.1} parent=1 // pred_check
      _
    $region27: #{tpu_custom_call.1} parent=1 // pred_check_branch
      %57 = sbr.rel (0) target = $region29
    $region28: #{tpu_custom_call.1} parent=1 // pred_region
      %58 = dma.done [#allocation6], 2048
    $region29: #{tpu_custom_call.1} parent=1 // pred_fallthru
      _
    %v60 = vld [vmem:[#allocation5] sm:$0xff]
    %v61 = vld [vmem:[#allocation5 + $0x8] sm:$0xff]
    %v62 = vld [vmem:[#allocation5 + $0x10] sm:$0xff]
    %v63 = vld [vmem:[#allocation5 + $0x18] sm:$0xff]
    %v64 = vld [vmem:[#allocation5 + $0x20] sm:$0xff]
    %v65 = vld [vmem:[#allocation5 + $0x28] sm:$0xff]
    %v66 = vld [vmem:[#allocation5 + $0x30] sm:$0xff]
    %v67 = vld [vmem:[#allocation5 + $0x38] sm:$0xff]
    %v68 = vld [vmem:[#allocation5 + $0x40] sm:$0xff]
    %v69 = vld [vmem:[#allocation5 + $0x48] sm:$0xff]
    %v70 = vld [vmem:[#allocation5 + $0x50] sm:$0xff]
    %v71 = vld [vmem:[#allocation5 + $0x58] sm:$0xff]
    %v72 = vld [vmem:[#allocation5 + $0x60] sm:$0xff]
    %v73 = vld [vmem:[#allocation5 + $0x68] sm:$0xff]
    %v74 = vld [vmem:[#allocation5 + $0x70] sm:$0xff]
    %v75 = vld [vmem:[#allocation5 + $0x78] sm:$0xff]
    %76 = vst [vmem:[#allocation8] sm:$0xff] %v60
    %77 = vst [vmem:[#allocation8 + $0x8] sm:$0xff] %v61
    %78 = vst [vmem:[#allocation8 + $0x10] sm:$0xff] %v62
    %79 = vst [vmem:[#allocation8 + $0x18] sm:$0xff] %v63
    %80 = vst [vmem:[#allocation8 + $0x20] sm:$0xff] %v64
    %81 = vst [vmem:[#allocation8 + $0x28] sm:$0xff] %v65
    %82 = vst [vmem:[#allocation8 + $0x30] sm:$0xff] %v66
    %83 = vst [vmem:[#allocation8 + $0x38] sm:$0xff] %v67
    %84 = vst [vmem:[#allocation8 + $0x40] sm:$0xff] %v68
    %85 = vst [vmem:[#allocation8 + $0x48] sm:$0xff] %v69
    %86 = vst [vmem:[#allocation8 + $0x50] sm:$0xff] %v70
    %87 = vst [vmem:[#allocation8 + $0x58] sm:$0xff] %v71
    %88 = vst [vmem:[#allocation8 + $0x60] sm:$0xff] %v72
    %89 = vst [vmem:[#allocation8 + $0x68] sm:$0xff] %v73
    %90 = vst [vmem:[#allocation8 + $0x70] sm:$0xff] %v74
    %91 = vst [vmem:[#allocation8 + $0x78] sm:$0xff] %v75
    %v92 = vld [vmem:[#allocation2] sm:$0xf]
    %v93 = vld [vmem:[#allocation2 + $0x4] sm:$0xf]
    %v94 = vld [vmem:[#allocation2 + $0x8] sm:$0xf]
    %v95 = vld [vmem:[#allocation2 + $0xc] sm:$0xf]
    %v96 = vld [vmem:[#allocation2 + $0x10] sm:$0xf]
    %v97 = vld [vmem:[#allocation2 + $0x14] sm:$0xf]
    %v98 = vld [vmem:[#allocation2 + $0x18] sm:$0xf]
    %v99 = vld [vmem:[#allocation2 + $0x1c] sm:$0xf]
    %v100 = vld [vmem:[#allocation2 + $0x20] sm:$0xf]
    %v101 = vld [vmem:[#allocation2 + $0x24] sm:$0xf]
    %v102 = vld [vmem:[#allocation2 + $0x28] sm:$0xf]
    %v103 = vld [vmem:[#allocation2 + $0x2c] sm:$0xf]
    %v104 = vld [vmem:[#allocation2 + $0x30] sm:$0xf]
    %v105 = vld [vmem:[#allocation2 + $0x34] sm:$0xf]
    %v106 = vld [vmem:[#allocation2 + $0x38] sm:$0xf]
    %v107 = vld [vmem:[#allocation2 + $0x3c] sm:$0xf]
    %v108 = vld [vmem:[#allocation8] sm:$0xff]
    %v109 = vld [vmem:[#allocation8 + $0x8] sm:$0xff]
    %v110 = vld [vmem:[#allocation8 + $0x10] sm:$0xff]
    %v111 = vld [vmem:[#allocation8 + $0x18] sm:$0xff]
    %v112 = vld [vmem:[#allocation8 + $0x20] sm:$0xff]
    %v113 = vld [vmem:[#allocation8 + $0x28] sm:$0xff]
    %v114 = vld [vmem:[#allocation8 + $0x30] sm:$0xff]
    %v115 = vld [vmem:[#allocation8 + $0x38] sm:$0xff]
    %v116 = vld [vmem:[#allocation8 + $0x40] sm:$0xff]
    %v117 = vld [vmem:[#allocation8 + $0x48] sm:$0xff]
    %v118 = vld [vmem:[#allocation8 + $0x50] sm:$0xff]
    %v119 = vld [vmem:[#allocation8 + $0x58] sm:$0xff]
    %v120 = vld [vmem:[#allocation8 + $0x60] sm:$0xff]
    %v121 = vld [vmem:[#allocation8 + $0x68] sm:$0xff]
    %v122 = vld [vmem:[#allocation8 + $0x70] sm:$0xff]
    %v123 = vld [vmem:[#allocation8 + $0x78] sm:$0xff]
    %v124 = vpack.c.bf16 %v109, %v108
    %v125 = vpack.c.bf16 %v111, %v110
    %v126 = vpack.c.bf16 %v113, %v112
    %v127 = vpack.c.bf16 %v115, %v114
    %v128 = vpack.c.bf16 %v117, %v116
    %v129 = vpack.c.bf16 %v119, %v118
    %v130 = vpack.c.bf16 %v121, %v120
    %v131 = vpack.c.bf16 %v123, %v122
    %v148 = vunpack.c.l.b16 %v92
    %v149 = vunpack.c.l.b16 %v93
    %v150 = vunpack.c.l.b16 %v94
    %v151 = vunpack.c.l.b16 %v95
    %v152 = vunpack.c.l.b16 %v96
    %v153 = vunpack.c.l.b16 %v97
    %v154 = vunpack.c.l.b16 %v98
    %v155 = vunpack.c.l.b16 %v99
    %v156 = vunpack.c.l.b16 %v100
    %v157 = vunpack.c.l.b16 %v101
    %v158 = vunpack.c.l.b16 %v102
    %v159 = vunpack.c.l.b16 %v103
    %v160 = vunpack.c.l.b16 %v104
    %v161 = vunpack.c.l.b16 %v105
    %v162 = vunpack.c.l.b16 %v106
    %v163 = vunpack.c.l.b16 %v107
    %v164 = vpack.c.b16 %v149, %v148
    %v165 = vpack.c.b16 %v151, %v150
    %v166 = vpack.c.b16 %v153, %v152
    %v167 = vpack.c.b16 %v155, %v154
    %v168 = vpack.c.b16 %v157, %v156
    %v169 = vpack.c.b16 %v159, %v158
    %v170 = vpack.c.b16 %v161, %v160
    %v171 = vpack.c.b16 %v163, %v162
    %180 = vmatprep.subr.bf16.mxu0 0
    %181 = vmatpush1.bf16.msra.mxu0 %v131
    %182 = vmatprep.subr.bf16.mxu0 0
    %183 = vmatpush1.bf16.msra.mxu0 %v130
    %184 = vmatprep.subr.bf16.mxu0 0
    %185 = vmatpush1.bf16.msra.mxu0 %v129
    %186 = vmatprep.subr.bf16.mxu0 0
    %187 = vmatpush1.bf16.msra.mxu0 %v128
    %188 = vmatprep.subr.bf16.mxu0 0
    %189 = vmatpush1.bf16.msra.mxu0 %v127
    %190 = vmatprep.subr.bf16.mxu0 0
    %191 = vmatpush1.bf16.msra.mxu0 %v126
    %192 = vmatprep.subr.bf16.mxu0 0
    %193 = vmatpush1.bf16.msra.mxu0 %v125
    %194 = vmatprep.subr.bf16.mxu0 0
    %195 = vmatpush1.bf16.msra.mxu0 %v124
    %196 = vmatprep.subr.bf16.mxu0 0
    %197 = vmatpush2.bf16.msra.mxu0 0
    %198 = vmatprep.subr.bf16.mxu0 0
    %199 = vmatpush2.bf16.msra.mxu0 0
    %200 = vmatprep.subr.bf16.mxu0 0
    %201 = vmatpush2.bf16.msra.mxu0 0
    %202 = vmatprep.subr.bf16.mxu0 0
    %203 = vmatpush2.bf16.msra.mxu0 0
    %204 = vmatprep.subr.bf16.mxu0 0
    %205 = vmatpush2.bf16.msra.mxu0 0
    %206 = vmatprep.subr.bf16.mxu0 0
    %207 = vmatpush2.bf16.msra.mxu0 0
    %208 = vmatprep.subr.bf16.mxu0 0
    %209 = vmatpush2.bf16.msra.mxu0 0
    %210 = vmatprep.subr.bf16.mxu0 0
    %211 = vmatpush2.bf16.msra.mxu0 0
    %212 = vmatprep.mubr.bf16.mxu0 0
    %213 = vmatmul.mubr.bf16.gmra.mxu0 %v164
    %v214 = vpop.f32.mrf.mxu0
    %v215 = vadd.f32 0.0, %v214
    %v216 = vpop.f32.mrf.mxu0
    %v217 = vpop.f32.mrf.mxu0
    %v218 = vadd.f32 0.0, %v217
    %v219 = vpop.f32.mrf.mxu0
    %220 = vmatprep.mubr.bf16.mxu0 0
    %221 = vmatmul.mubr.bf16.gmra.mxu0 %v165
    %v222 = vpop.f32.mrf.mxu0
    %v223 = vadd.f32 0.0, %v222
    %v224 = vpop.f32.mrf.mxu0
    %v225 = vpop.f32.mrf.mxu0
    %v226 = vadd.f32 0.0, %v225
    %v227 = vpop.f32.mrf.mxu0
    %228 = vmatprep.mubr.bf16.mxu0 0
    %229 = vmatmul.mubr.bf16.gmra.mxu0 %v166
    %v230 = vpop.f32.mrf.mxu0
    %v231 = vadd.f32 0.0, %v230
    %v232 = vpop.f32.mrf.mxu0
    %v233 = vpop.f32.mrf.mxu0
    %v234 = vadd.f32 0.0, %v233
    %v235 = vpop.f32.mrf.mxu0
    %236 = vmatprep.mubr.bf16.mxu0 0
    %237 = vmatmul.mubr.bf16.gmra.mxu0 %v167
    %v238 = vpop.f32.mrf.mxu0
    %v239 = vadd.f32 0.0, %v238
    %v240 = vpop.f32.mrf.mxu0
    %v241 = vpop.f32.mrf.mxu0
    %v242 = vadd.f32 0.0, %v241
    %v243 = vpop.f32.mrf.mxu0
    %244 = vmatprep.mubr.bf16.mxu0 0
    %245 = vmatmul.mubr.bf16.gmra.mxu0 %v168
    %v246 = vpop.f32.mrf.mxu0
    %v247 = vadd.f32 0.0, %v246
    %v248 = vpop.f32.mrf.mxu0
    %v249 = vpop.f32.mrf.mxu0
    %v250 = vadd.f32 0.0, %v249
    %v251 = vpop.f32.mrf.mxu0
    %252 = vmatprep.mubr.bf16.mxu0 0
    %253 = vmatmul.mubr.bf16.gmra.mxu0 %v169
    %v254 = vpop.f32.mrf.mxu0
    %v255 = vadd.f32 0.0, %v254
    %v256 = vpop.f32.mrf.mxu0
    %v257 = vpop.f32.mrf.mxu0
    %v258 = vadd.f32 0.0, %v257
    %v259 = vpop.f32.mrf.mxu0
    %260 = vmatprep.mubr.bf16.mxu0 0
    %261 = vmatmul.mubr.bf16.gmra.mxu0 %v170
    %v262 = vpop.f32.mrf.mxu0
    %v263 = vadd.f32 0.0, %v262
    %v264 = vpop.f32.mrf.mxu0
    %v265 = vpop.f32.mrf.mxu0
    %v266 = vadd.f32 0.0, %v265
    %v267 = vpop.f32.mrf.mxu0
    %268 = vmatprep.mubr.bf16.mxu0 0
    %269 = vmatmul.mubr.bf16.gmra.mxu0 %v171
    %v270 = vpop.f32.mrf.mxu0
    %v271 = vadd.f32 0.0, %v270
    %v272 = vpop.f32.mrf.mxu0
    %v273 = vpop.f32.mrf.mxu0
    %v274 = vadd.f32 0.0, %v273
    %v275 = vpop.f32.mrf.mxu0
    %276 = vdwg.mxu0
    %v277 = vpack.c.bf16 %v218, %v215
    %v278 = vpack.c.bf16 %v226, %v223
    %v279 = vpack.c.bf16 %v234, %v231
    %v280 = vpack.c.bf16 %v242, %v239
    %v281 = vpack.c.bf16 %v250, %v247
    %v282 = vpack.c.bf16 %v258, %v255
    %v283 = vpack.c.bf16 %v266, %v263
    %v284 = vpack.c.bf16 %v274, %v271
    %v285 = vld [vmem:[#allocation7] sm:$0xf]
    %v286 = vld [vmem:[#allocation7 + $0x4] sm:$0xf]
    %v287 = vld [vmem:[#allocation7 + $0x8] sm:$0xf]
    %v288 = vld [vmem:[#allocation7 + $0xc] sm:$0xf]
    %v289 = vld [vmem:[#allocation7 + $0x10] sm:$0xf]
    %v290 = vld [vmem:[#allocation7 + $0x14] sm:$0xf]
    %v291 = vld [vmem:[#allocation7 + $0x18] sm:$0xf]
    %v292 = vld [vmem:[#allocation7 + $0x1c] sm:$0xf]
    %v293 = vld [vmem:[#allocation7 + $0x20] sm:$0xf]
    %v294 = vld [vmem:[#allocation7 + $0x24] sm:$0xf]
    %v295 = vld [vmem:[#allocation7 + $0x28] sm:$0xf]
    %v296 = vld [vmem:[#allocation7 + $0x2c] sm:$0xf]
    %v297 = vld [vmem:[#allocation7 + $0x30] sm:$0xf]
    %v298 = vld [vmem:[#allocation7 + $0x34] sm:$0xf]
    %v299 = vld [vmem:[#allocation7 + $0x38] sm:$0xf]
    %v300 = vld [vmem:[#allocation7 + $0x3c] sm:$0xf]
    %v301 = vld [vmem:[%s3] sm:$0x1]
    %v303 = vlaneseq
    %v304 = vshrl.u32 %v303, 7
    %v305 = vsub.s32 0, %v304
    %v306 = vrot.slane %v301, %v305
    %v324 = vunpack.c.l.b16 %v285
    %v325 = vunpack.c.l.b16 %v286
    %v326 = vunpack.c.l.b16 %v287
    %v327 = vunpack.c.l.b16 %v288
    %v328 = vunpack.c.l.b16 %v289
    %v329 = vunpack.c.l.b16 %v290
    %v330 = vunpack.c.l.b16 %v291
    %v331 = vunpack.c.l.b16 %v292
    %v332 = vunpack.c.l.b16 %v293
    %v333 = vunpack.c.l.b16 %v294
    %v334 = vunpack.c.l.b16 %v295
    %v335 = vunpack.c.l.b16 %v296
    %v336 = vunpack.c.l.b16 %v297
    %v337 = vunpack.c.l.b16 %v298
    %v338 = vunpack.c.l.b16 %v299
    %v339 = vunpack.c.l.b16 %v300
    %v340 = vpack.c.b16 %v325, %v324
    %v341 = vpack.c.b16 %v327, %v326
    %v342 = vpack.c.b16 %v329, %v328
    %v343 = vpack.c.b16 %v331, %v330
    %v344 = vpack.c.b16 %v333, %v332
    %v345 = vpack.c.b16 %v335, %v334
    %v346 = vpack.c.b16 %v337, %v336
    %v347 = vpack.c.b16 %v339, %v338
    %356 = vmatprep.subr.bf16.mxu0 0
    %357 = vmatpush1.bf16.msra.mxu0 %v347
    %358 = vmatprep.subr.bf16.mxu0 0
    %359 = vmatpush1.bf16.msra.mxu0 %v346
    %360 = vmatprep.subr.bf16.mxu0 0
    %361 = vmatpush1.bf16.msra.mxu0 %v345
    %362 = vmatprep.subr.bf16.mxu0 0
    %363 = vmatpush1.bf16.msra.mxu0 %v344
    %364 = vmatprep.subr.bf16.mxu0 0
    %365 = vmatpush1.bf16.msra.mxu0 %v343
    %366 = vmatprep.subr.bf16.mxu0 0
    %367 = vmatpush1.bf16.msra.mxu0 %v342
    %368 = vmatprep.subr.bf16.mxu0 0
    %369 = vmatpush1.bf16.msra.mxu0 %v341
    %370 = vmatprep.subr.bf16.mxu0 0
    %371 = vmatpush1.bf16.msra.mxu0 %v340
    %372 = vmatprep.subr.bf16.mxu0 0
    %373 = vmatpush2.bf16.msra.mxu0 0
    %374 = vmatprep.subr.bf16.mxu0 0
    %375 = vmatpush2.bf16.msra.mxu0 0
    %376 = vmatprep.subr.bf16.mxu0 0
    %377 = vmatpush2.bf16.msra.mxu0 0
    %378 = vmatprep.subr.bf16.mxu0 0
    %379 = vmatpush2.bf16.msra.mxu0 0
    %380 = vmatprep.subr.bf16.mxu0 0
    %381 = vmatpush2.bf16.msra.mxu0 0
    %382 = vmatprep.subr.bf16.mxu0 0
    %383 = vmatpush2.bf16.msra.mxu0 0
    %384 = vmatprep.subr.bf16.mxu0 0
    %385 = vmatpush2.bf16.msra.mxu0 0
    %386 = vmatprep.subr.bf16.mxu0 0
    %387 = vmatpush2.bf16.msra.mxu0 0
    %388 = vmatprep.mubr.bf16.mxu0 0
    %389 = vmatmul.mubr.bf16.gmra.mxu0 %v277
    %v390 = vpop.f32.mrf.mxu0
    %v391 = vadd.f32 %v306, %v390
    %v392 = vpop.f32.mrf.mxu0
    %v393 = vpop.f32.mrf.mxu0
    %v394 = vadd.f32 %v306, %v393
    %v395 = vpop.f32.mrf.mxu0
    %396 = vmatprep.mubr.bf16.mxu0 0
    %397 = vmatmul.mubr.bf16.gmra.mxu0 %v278
    %v398 = vpop.f32.mrf.mxu0
    %v399 = vadd.f32 %v306, %v398
    %v400 = vpop.f32.mrf.mxu0
    %v401 = vpop.f32.mrf.mxu0
    %v402 = vadd.f32 %v306, %v401
    %v403 = vpop.f32.mrf.mxu0
    %404 = vmatprep.mubr.bf16.mxu0 0
    %405 = vmatmul.mubr.bf16.gmra.mxu0 %v279
    %v406 = vpop.f32.mrf.mxu0
    %v407 = vadd.f32 %v306, %v406
    %v408 = vpop.f32.mrf.mxu0
    %v409 = vpop.f32.mrf.mxu0
    %v410 = vadd.f32 %v306, %v409
    %v411 = vpop.f32.mrf.mxu0
    %412 = vmatprep.mubr.bf16.mxu0 0
    %413 = vmatmul.mubr.bf16.gmra.mxu0 %v280
    %v414 = vpop.f32.mrf.mxu0
    %v415 = vadd.f32 %v306, %v414
    %v416 = vpop.f32.mrf.mxu0
    %v417 = vpop.f32.mrf.mxu0
    %v418 = vadd.f32 %v306, %v417
    %v419 = vpop.f32.mrf.mxu0
    %420 = vmatprep.mubr.bf16.mxu0 0
    %421 = vmatmul.mubr.bf16.gmra.mxu0 %v281
    %v422 = vpop.f32.mrf.mxu0
    %v423 = vadd.f32 %v306, %v422
    %v424 = vpop.f32.mrf.mxu0
    %v425 = vpop.f32.mrf.mxu0
    %v426 = vadd.f32 %v306, %v425
    %v427 = vpop.f32.mrf.mxu0
    %428 = vmatprep.mubr.bf16.mxu0 0
    %429 = vmatmul.mubr.bf16.gmra.mxu0 %v282
    %v430 = vpop.f32.mrf.mxu0
    %v431 = vadd.f32 %v306, %v430
    %v432 = vpop.f32.mrf.mxu0
    %v433 = vpop.f32.mrf.mxu0
    %v434 = vadd.f32 %v306, %v433
    %v435 = vpop.f32.mrf.mxu0
    %436 = vmatprep.mubr.bf16.mxu0 0
    %437 = vmatmul.mubr.bf16.gmra.mxu0 %v283
    %v438 = vpop.f32.mrf.mxu0
    %v439 = vadd.f32 %v306, %v438
    %v440 = vpop.f32.mrf.mxu0
    %v441 = vpop.f32.mrf.mxu0
    %v442 = vadd.f32 %v306, %v441
    %v443 = vpop.f32.mrf.mxu0
    %444 = vmatprep.mubr.bf16.mxu0 0
    %445 = vmatmul.mubr.bf16.gmra.mxu0 %v284
    %v446 = vpop.f32.mrf.mxu0
    %v447 = vadd.f32 %v306, %v446
    %v448 = vpop.f32.mrf.mxu0
    %v449 = vpop.f32.mrf.mxu0
    %v450 = vadd.f32 %v306, %v449
    %v451 = vpop.f32.mrf.mxu0
    %452 = vdwg.mxu0
    %v453 = vmax.f32 %v391, 0.0
    %v454 = vmax.f32 %v394, 0.0
    %v455 = vmax.f32 %v399, 0.0
    %v456 = vmax.f32 %v402, 0.0
    %v457 = vmax.f32 %v407, 0.0
    %v458 = vmax.f32 %v410, 0.0
    %v459 = vmax.f32 %v415, 0.0
    %v460 = vmax.f32 %v418, 0.0
    %v461 = vmax.f32 %v423, 0.0
    %v462 = vmax.f32 %v426, 0.0
    %v463 = vmax.f32 %v431, 0.0
    %v464 = vmax.f32 %v434, 0.0
    %v465 = vmax.f32 %v439, 0.0
    %v466 = vmax.f32 %v442, 0.0
    %v467 = vmax.f32 %v447, 0.0
    %v468 = vmax.f32 %v450, 0.0
    %469 = vst [vmem:[#allocation8] sm:$0xff] %v453
    %470 = vst [vmem:[#allocation8 + $0x8] sm:$0xff] %v454
    %471 = vst [vmem:[#allocation8 + $0x10] sm:$0xff] %v455
    %472 = vst [vmem:[#allocation8 + $0x18] sm:$0xff] %v456
    %473 = vst [vmem:[#allocation8 + $0x20] sm:$0xff] %v457
    %474 = vst [vmem:[#allocation8 + $0x28] sm:$0xff] %v458
    %475 = vst [vmem:[#allocation8 + $0x30] sm:$0xff] %v459
    %476 = vst [vmem:[#allocation8 + $0x38] sm:$0xff] %v460
    %477 = vst [vmem:[#allocation8 + $0x40] sm:$0xff] %v461
    %478 = vst [vmem:[#allocation8 + $0x48] sm:$0xff] %v462
    %479 = vst [vmem:[#allocation8 + $0x50] sm:$0xff] %v463
    %480 = vst [vmem:[#allocation8 + $0x58] sm:$0xff] %v464
    %481 = vst [vmem:[#allocation8 + $0x60] sm:$0xff] %v465
    %482 = vst [vmem:[#allocation8 + $0x68] sm:$0xff] %v466
    %483 = vst [vmem:[#allocation8 + $0x70] sm:$0xff] %v467
    %484 = vst [vmem:[#allocation8 + $0x78] sm:$0xff] %v468
    %v485 = vld [vmem:[#allocation8] sm:$0xff]
    %v486 = vld [vmem:[#allocation8 + $0x8] sm:$0xff]
    %v487 = vld [vmem:[#allocation8 + $0x10] sm:$0xff]
    %v488 = vld [vmem:[#allocation8 + $0x18] sm:$0xff]
    %v489 = vld [vmem:[#allocation8 + $0x20] sm:$0xff]
    %v490 = vld [vmem:[#allocation8 + $0x28] sm:$0xff]
    %v491 = vld [vmem:[#allocation8 + $0x30] sm:$0xff]
    %v492 = vld [vmem:[#allocation8 + $0x38] sm:$0xff]
    %v493 = vld [vmem:[#allocation8 + $0x40] sm:$0xff]
    %v494 = vld [vmem:[#allocation8 + $0x48] sm:$0xff]
    %v495 = vld [vmem:[#allocation8 + $0x50] sm:$0xff]
    %v496 = vld [vmem:[#allocation8 + $0x58] sm:$0xff]
    %v497 = vld [vmem:[#allocation8 + $0x60] sm:$0xff]
    %v498 = vld [vmem:[#allocation8 + $0x68] sm:$0xff]
    %v499 = vld [vmem:[#allocation8 + $0x70] sm:$0xff]
    %v500 = vld [vmem:[#allocation8 + $0x78] sm:$0xff]
    %v501 = vpack.c.bf16 %v486, %v485
    %v502 = vpack.c.bf16 %v488, %v487
    %v503 = vpack.c.bf16 %v490, %v489
    %v504 = vpack.c.bf16 %v492, %v491
    %v505 = vpack.c.bf16 %v494, %v493
    %v506 = vpack.c.bf16 %v496, %v495
    %v507 = vpack.c.bf16 %v498, %v497
    %v508 = vpack.c.bf16 %v500, %v499
    %509 = vmatprep.subr.bf16.mxu0 0
    %510 = vmatpush1.bf16.msra.mxu0 %v508
    %511 = vmatprep.subr.bf16.mxu0 0
    %512 = vmatpush1.bf16.msra.mxu0 %v507
    %513 = vmatprep.subr.bf16.mxu0 0
    %514 = vmatpush1.bf16.msra.mxu0 %v506
    %515 = vmatprep.subr.bf16.mxu0 0
    %516 = vmatpush1.bf16.msra.mxu0 %v505
    %517 = vmatprep.subr.bf16.mxu0 0
    %518 = vmatpush1.bf16.msra.mxu0 %v504
    %519 = vmatprep.subr.bf16.mxu0 0
    %520 = vmatpush1.bf16.msra.mxu0 %v503
    %521 = vmatprep.subr.bf16.mxu0 0
    %522 = vmatpush1.bf16.msra.mxu0 %v502
    %523 = vmatprep.subr.bf16.mxu0 0
    %524 = vmatpush1.bf16.msra.mxu0 %v501
    %525 = vmatprep.subr.bf16.mxu0 0
    %526 = vmatpush2.bf16.msra.mxu0 0
    %527 = vmatprep.subr.bf16.mxu0 0
    %528 = vmatpush2.bf16.msra.mxu0 0
    %529 = vmatprep.subr.bf16.mxu0 0
    %530 = vmatpush2.bf16.msra.mxu0 0
    %531 = vmatprep.subr.bf16.mxu0 0
    %532 = vmatpush2.bf16.msra.mxu0 0
    %533 = vmatprep.subr.bf16.mxu0 0
    %534 = vmatpush2.bf16.msra.mxu0 0
    %535 = vmatprep.subr.bf16.mxu0 0
    %536 = vmatpush2.bf16.msra.mxu0 0
    %537 = vmatprep.subr.bf16.mxu0 0
    %538 = vmatpush2.bf16.msra.mxu0 0
    %539 = vmatprep.subr.bf16.mxu0 0
    %540 = vmatpush2.bf16.msra.mxu0 0
    %541 = vmatprep.mubr.bf16.mxu0 0
    %542 = vmatmul.mubr.bf16.gmra.mxu0 %v164
    %v543 = vpop.f32.mrf.mxu0
    %v544 = vadd.f32 0.0, %v543
    %v545 = vpop.f32.mrf.mxu0
    %v546 = vpop.f32.mrf.mxu0
    %v547 = vadd.f32 0.0, %v546
    %v548 = vpop.f32.mrf.mxu0
    %549 = vmatprep.mubr.bf16.mxu0 0
    %550 = vmatmul.mubr.bf16.gmra.mxu0 %v165
    %v551 = vpop.f32.mrf.mxu0
    %v552 = vadd.f32 0.0, %v551
    %v553 = vpop.f32.mrf.mxu0
    %v554 = vpop.f32.mrf.mxu0
    %v555 = vadd.f32 0.0, %v554
    %v556 = vpop.f32.mrf.mxu0
    %557 = vmatprep.mubr.bf16.mxu0 0
    %558 = vmatmul.mubr.bf16.gmra.mxu0 %v166
    %v559 = vpop.f32.mrf.mxu0
    %v560 = vadd.f32 0.0, %v559
    %v561 = vpop.f32.mrf.mxu0
    %v562 = vpop.f32.mrf.mxu0
    %v563 = vadd.f32 0.0, %v562
    %v564 = vpop.f32.mrf.mxu0
    %565 = vmatprep.mubr.bf16.mxu0 0
    %566 = vmatmul.mubr.bf16.gmra.mxu0 %v167
    %v567 = vpop.f32.mrf.mxu0
    %v568 = vadd.f32 0.0, %v567
    %v569 = vpop.f32.mrf.mxu0
    %v570 = vpop.f32.mrf.mxu0
    %v571 = vadd.f32 0.0, %v570
    %v572 = vpop.f32.mrf.mxu0
    %573 = vmatprep.mubr.bf16.mxu0 0
    %574 = vmatmul.mubr.bf16.gmra.mxu0 %v168
    %v575 = vpop.f32.mrf.mxu0
    %v576 = vadd.f32 0.0, %v575
    %v577 = vpop.f32.mrf.mxu0
    %v578 = vpop.f32.mrf.mxu0
    %v579 = vadd.f32 0.0, %v578
    %v580 = vpop.f32.mrf.mxu0
    %581 = vmatprep.mubr.bf16.mxu0 0
    %582 = vmatmul.mubr.bf16.gmra.mxu0 %v169
    %v583 = vpop.f32.mrf.mxu0
    %v584 = vadd.f32 0.0, %v583
    %v585 = vpop.f32.mrf.mxu0
    %v586 = vpop.f32.mrf.mxu0
    %v587 = vadd.f32 0.0, %v586
    %v588 = vpop.f32.mrf.mxu0
    %589 = vmatprep.mubr.bf16.mxu0 0
    %590 = vmatmul.mubr.bf16.gmra.mxu0 %v170
    %v591 = vpop.f32.mrf.mxu0
    %v592 = vadd.f32 0.0, %v591
    %v593 = vpop.f32.mrf.mxu0
    %v594 = vpop.f32.mrf.mxu0
    %v595 = vadd.f32 0.0, %v594
    %v596 = vpop.f32.mrf.mxu0
    %597 = vmatprep.mubr.bf16.mxu0 0
    %598 = vmatmul.mubr.bf16.gmra.mxu0 %v171
    %v599 = vpop.f32.mrf.mxu0
    %v600 = vadd.f32 0.0, %v599
    %v601 = vpop.f32.mrf.mxu0
    %v602 = vpop.f32.mrf.mxu0
    %v603 = vadd.f32 0.0, %v602
    %v604 = vpop.f32.mrf.mxu0
    %605 = vdwg.mxu0
    %v606 = vpack.c.bf16 %v547, %v544
    %v607 = vpack.c.bf16 %v555, %v552
    %v608 = vpack.c.bf16 %v563, %v560
    %v609 = vpack.c.bf16 %v571, %v568
    %v610 = vpack.c.bf16 %v579, %v576
    %v611 = vpack.c.bf16 %v587, %v584
    %v612 = vpack.c.bf16 %v595, %v592
    %v613 = vpack.c.bf16 %v603, %v600
    %s614 = scalar_lea.vmem [#allocation7], 64
    %v615 = vld [vmem:[%s614] sm:$0xf]
    %v616 = vld [vmem:[%s614 + $0x4] sm:$0xf]
    %v617 = vld [vmem:[%s614 + $0x8] sm:$0xf]
    %v618 = vld [vmem:[%s614 + $0xc] sm:$0xf]
    %v619 = vld [vmem:[%s614 + $0x10] sm:$0xf]
    %v620 = vld [vmem:[%s614 + $0x14] sm:$0xf]
    %v621 = vld [vmem:[%s614 + $0x18] sm:$0xf]
    %v622 = vld [vmem:[%s614 + $0x1c] sm:$0xf]
    %v623 = vld [vmem:[%s614 + $0x20] sm:$0xf]
    %v624 = vld [vmem:[%s614 + $0x24] sm:$0xf]
    %v625 = vld [vmem:[%s614 + $0x28] sm:$0xf]
    %v626 = vld [vmem:[%s614 + $0x2c] sm:$0xf]
    %v627 = vld [vmem:[%s614 + $0x30] sm:$0xf]
    %v628 = vld [vmem:[%s614 + $0x34] sm:$0xf]
    %v629 = vld [vmem:[%s614 + $0x38] sm:$0xf]
    %v630 = vld [vmem:[%s614 + $0x3c] sm:$0xf]
    %s631 = scalar_lea.vmem %s3, 1
    %v632 = vld [vmem:[%s631] sm:$0x1]
    %v634 = vlaneseq
    %v635 = vshrl.u32 %v634, 7
    %v636 = vsub.s32 0, %v635
    %v637 = vrot.slane %v632, %v636
    %v655 = vunpack.c.l.b16 %v615
    %v656 = vunpack.c.l.b16 %v616
    %v657 = vunpack.c.l.b16 %v617
    %v658 = vunpack.c.l.b16 %v618
    %v659 = vunpack.c.l.b16 %v619
    %v660 = vunpack.c.l.b16 %v620
    %v661 = vunpack.c.l.b16 %v621
    %v662 = vunpack.c.l.b16 %v622
    %v663 = vunpack.c.l.b16 %v623
    %v664 = vunpack.c.l.b16 %v624
    %v665 = vunpack.c.l.b16 %v625
    %v666 = vunpack.c.l.b16 %v626
    %v667 = vunpack.c.l.b16 %v627
    %v668 = vunpack.c.l.b16 %v628
    %v669 = vunpack.c.l.b16 %v629
    %v670 = vunpack.c.l.b16 %v630
    %v671 = vpack.c.b16 %v656, %v655
    %v672 = vpack.c.b16 %v658, %v657
    %v673 = vpack.c.b16 %v660, %v659
    %v674 = vpack.c.b16 %v662, %v661
    %v675 = vpack.c.b16 %v664, %v663
    %v676 = vpack.c.b16 %v666, %v665
    %v677 = vpack.c.b16 %v668, %v667
    %v678 = vpack.c.b16 %v670, %v669
    %687 = vmatprep.subr.bf16.mxu0 0
    %688 = vmatpush1.bf16.msra.mxu0 %v678
    %689 = vmatprep.subr.bf16.mxu0 0
    %690 = vmatpush1.bf16.msra.mxu0 %v677
    %691 = vmatprep.subr.bf16.mxu0 0
    %692 = vmatpush1.bf16.msra.mxu0 %v676
    %693 = vmatprep.subr.bf16.mxu0 0
    %694 = vmatpush1.bf16.msra.mxu0 %v675
    %695 = vmatprep.subr.bf16.mxu0 0
    %696 = vmatpush1.bf16.msra.mxu0 %v674
    %697 = vmatprep.subr.bf16.mxu0 0
    %698 = vmatpush1.bf16.msra.mxu0 %v673
    %699 = vmatprep.subr.bf16.mxu0 0
    %700 = vmatpush1.bf16.msra.mxu0 %v672
    %701 = vmatprep.subr.bf16.mxu0 0
    %702 = vmatpush1.bf16.msra.mxu0 %v671
    %703 = vmatprep.subr.bf16.mxu0 0
    %704 = vmatpush2.bf16.msra.mxu0 0
    %705 = vmatprep.subr.bf16.mxu0 0
    %706 = vmatpush2.bf16.msra.mxu0 0
    %707 = vmatprep.subr.bf16.mxu0 0
    %708 = vmatpush2.bf16.msra.mxu0 0
    %709 = vmatprep.subr.bf16.mxu0 0
    %710 = vmatpush2.bf16.msra.mxu0 0
    %711 = vmatprep.subr.bf16.mxu0 0
    %712 = vmatpush2.bf16.msra.mxu0 0
    %713 = vmatprep.subr.bf16.mxu0 0
    %714 = vmatpush2.bf16.msra.mxu0 0
    %715 = vmatprep.subr.bf16.mxu0 0
    %716 = vmatpush2.bf16.msra.mxu0 0
    %717 = vmatprep.subr.bf16.mxu0 0
    %718 = vmatpush2.bf16.msra.mxu0 0
    %719 = vmatprep.mubr.bf16.mxu0 0
    %720 = vmatmul.mubr.bf16.gmra.mxu0 %v606
    %v721 = vpop.f32.mrf.mxu0
    %v722 = vadd.f32 %v637, %v721
    %v723 = vpop.f32.mrf.mxu0
    %v724 = vpop.f32.mrf.mxu0
    %v725 = vadd.f32 %v637, %v724
    %v726 = vpop.f32.mrf.mxu0
    %727 = vmatprep.mubr.bf16.mxu0 0
    %728 = vmatmul.mubr.bf16.gmra.mxu0 %v607
    %v729 = vpop.f32.mrf.mxu0
    %v730 = vadd.f32 %v637, %v729
    %v731 = vpop.f32.mrf.mxu0
    %v732 = vpop.f32.mrf.mxu0
    %v733 = vadd.f32 %v637, %v732
    %v734 = vpop.f32.mrf.mxu0
    %735 = vmatprep.mubr.bf16.mxu0 0
    %736 = vmatmul.mubr.bf16.gmra.mxu0 %v608
    %v737 = vpop.f32.mrf.mxu0
    %v738 = vadd.f32 %v637, %v737
    %v739 = vpop.f32.mrf.mxu0
    %v740 = vpop.f32.mrf.mxu0
    %v741 = vadd.f32 %v637, %v740
    %v742 = vpop.f32.mrf.mxu0
    %743 = vmatprep.mubr.bf16.mxu0 0
    %744 = vmatmul.mubr.bf16.gmra.mxu0 %v609
    %v745 = vpop.f32.mrf.mxu0
    %v746 = vadd.f32 %v637, %v745
    %v747 = vpop.f32.mrf.mxu0
    %v748 = vpop.f32.mrf.mxu0
    %v749 = vadd.f32 %v637, %v748
    %v750 = vpop.f32.mrf.mxu0
    %751 = vmatprep.mubr.bf16.mxu0 0
    %752 = vmatmul.mubr.bf16.gmra.mxu0 %v610
    %v753 = vpop.f32.mrf.mxu0
    %v754 = vadd.f32 %v637, %v753
    %v755 = vpop.f32.mrf.mxu0
    %v756 = vpop.f32.mrf.mxu0
    %v757 = vadd.f32 %v637, %v756
    %v758 = vpop.f32.mrf.mxu0
    %759 = vmatprep.mubr.bf16.mxu0 0
    %760 = vmatmul.mubr.bf16.gmra.mxu0 %v611
    %v761 = vpop.f32.mrf.mxu0
    %v762 = vadd.f32 %v637, %v761
    %v763 = vpop.f32.mrf.mxu0
    %v764 = vpop.f32.mrf.mxu0
    %v765 = vadd.f32 %v637, %v764
    %v766 = vpop.f32.mrf.mxu0
    %767 = vmatprep.mubr.bf16.mxu0 0
    %768 = vmatmul.mubr.bf16.gmra.mxu0 %v612
    %v769 = vpop.f32.mrf.mxu0
    %v770 = vadd.f32 %v637, %v769
    %v771 = vpop.f32.mrf.mxu0
    %v772 = vpop.f32.mrf.mxu0
    %v773 = vadd.f32 %v637, %v772
    %v774 = vpop.f32.mrf.mxu0
    %775 = vmatprep.mubr.bf16.mxu0 0
    %776 = vmatmul.mubr.bf16.gmra.mxu0 %v613
    %v777 = vpop.f32.mrf.mxu0
    %v778 = vadd.f32 %v637, %v777
    %v779 = vpop.f32.mrf.mxu0
    %v780 = vpop.f32.mrf.mxu0
    %v781 = vadd.f32 %v637, %v780
    %v782 = vpop.f32.mrf.mxu0
    %783 = vdwg.mxu0
    %v784 = vmax.f32 %v722, 0.0
    %v785 = vmax.f32 %v725, 0.0
    %v786 = vmax.f32 %v730, 0.0
    %v787 = vmax.f32 %v733, 0.0
    %v788 = vmax.f32 %v738, 0.0
    %v789 = vmax.f32 %v741, 0.0
    %v790 = vmax.f32 %v746, 0.0
    %v791 = vmax.f32 %v749, 0.0
    %v792 = vmax.f32 %v754, 0.0
    %v793 = vmax.f32 %v757, 0.0
    %v794 = vmax.f32 %v762, 0.0
    %v795 = vmax.f32 %v765, 0.0
    %v796 = vmax.f32 %v770, 0.0
    %v797 = vmax.f32 %v773, 0.0
    %v798 = vmax.f32 %v778, 0.0
    %v799 = vmax.f32 %v781, 0.0
    %800 = vst [vmem:[#allocation8] sm:$0xff] %v784
    %801 = vst [vmem:[#allocation8 + $0x8] sm:$0xff] %v785
    %802 = vst [vmem:[#allocation8 + $0x10] sm:$0xff] %v786
    %803 = vst [vmem:[#allocation8 + $0x18] sm:$0xff] %v787
    %804 = vst [vmem:[#allocation8 + $0x20] sm:$0xff] %v788
    %805 = vst [vmem:[#allocation8 + $0x28] sm:$0xff] %v789
    %806 = vst [vmem:[#allocation8 + $0x30] sm:$0xff] %v790
    %807 = vst [vmem:[#allocation8 + $0x38] sm:$0xff] %v791
    %808 = vst [vmem:[#allocation8 + $0x40] sm:$0xff] %v792
    %809 = vst [vmem:[#allocation8 + $0x48] sm:$0xff] %v793
    %810 = vst [vmem:[#allocation8 + $0x50] sm:$0xff] %v794
    %811 = vst [vmem:[#allocation8 + $0x58] sm:$0xff] %v795
    %812 = vst [vmem:[#allocation8 + $0x60] sm:$0xff] %v796
    %813 = vst [vmem:[#allocation8 + $0x68] sm:$0xff] %v797
    %814 = vst [vmem:[#allocation8 + $0x70] sm:$0xff] %v798
    %815 = vst [vmem:[#allocation8 + $0x78] sm:$0xff] %v799
    // Predicated region
    $region30: #{tpu_custom_call.1} parent=1 // pred_check
      _
    $region31: #{tpu_custom_call.1} parent=1 // pred_check_branch
      %817 = sbr.rel (0) target = $region33
    $region32: #{tpu_custom_call.1} parent=1 // pred_region
      %s819 = ssub.s32 2048, 2048
      %820 = vsyncadd [#allocation4], %s819
      %s821 = sshll.u32 [#allocation8], 4
      %s822 = int_to_ptr.vmem [resolvable:$true] %s821
      %827 = dma.vmem_to_hbm [thread:$0]  %s822, 2048, %s4, [#allocation4], 128, 128, 8
    $region33: #{tpu_custom_call.1} parent=1 // pred_fallthru
      _
    // Predicated region
    $region34: #{tpu_custom_call.1} parent=1 // pred_check
      _
    $region35: #{tpu_custom_call.1} parent=1 // pred_check_branch
      %829 = sbr.rel (0) target = $region37
    $region36: #{tpu_custom_call.1} parent=1 // pred_region
      %830 = dma.done [#allocation4], 2048
    $region37: #{tpu_custom_call.1} parent=1 // pred_fallthru
      _
    %831 = vsyncpa [#allocation3], 1
    %832 = vsyncpa [#allocation6], 1
    %833 = vsyncpa [#allocation4], 1

</llo_original>
